<compile_context>
chip_gen: v7x
topology: tpu7x:2x2x1
jax: 0.10.0
libtpu: 0.0.40
codegen_flags: <defaults>
</compile_context>

<pallas_src>
import functools

import jax
import jax.numpy as jnp
from jax.experimental import pallas as pl
from jax.experimental.pallas import tpu as pltpu

EPS = 1e-5  # nn.BatchNorm1d default


def _matmul_bias_kernel(h_ref, w_ref, b_ref, o_ref):
    # h_ref: (tile_b, D)   bf16 activations (BN+ReLU already applied)
    # w_ref: (D, tile_n)   bf16 weight tile (streamed from HBM, no f32 upcast)
    # b_ref: (1, tile_n)   f32 bias tile
    # o_ref: (tile_b, tile_n) f32 output tile
    acc = jnp.dot(h_ref[...], w_ref[...], preferred_element_type=jnp.float32)
    o_ref[...] = (acc + b_ref[...]).astype(o_ref.dtype)


def _round_up(x, m):
    return ((x + m - 1) // m) * m


def _choose_tile_n(c, max_tile=1024):
    # Lane-aligned (multiple of 128). Keep >= 2 steps along C when C > 128 so the
    # "parallel" C axis can shard across v7x's two TensorCores, and cap the tile
    # so a double-buffered bf16 weight tile stays far below VMEM limits
    # (v5e scoped default 16 MiB, v7x physical 64 MiB).
    target = max(128, min(max_tile, pl.cdiv(c, 2)))
    return max(128, (target // 128) * 128)


def _choose_tile_b(b, max_tile=256):
    # f32 sublane alignment: multiple of 8.
    return min(_round_up(b, 8), max_tile)


@functools.partial(jax.jit, static_argnames=("tile_n", "tile_b"))
def linear_head(x, gamma, beta, running_mean, running_var, weight, bias,
                tile_n=None, tile_b=None):
    """Forward of BatchNorm1d(emb_dim) -> ReLU -> Linear(emb_dim, class_num).

    x:       (B, D) float32
    gamma, beta, running_mean, running_var: (D,)
    weight:  (D, C)  (transpose of torch's (C, D) nn.Linear weight)
    bias:    (C,)
    returns: (B, C) float32
    """
    B, D = x.shape
    Dw, C = weight.shape
    assert Dw == D

    # ---- fold BatchNorm (inference) into one scale/shift (f32 math) ----
    scale = gamma * jax.lax.rsqrt(running_var + EPS)
    shift = beta - running_mean * scale

    # ---- BN + ReLU applied once (O(B*D), tiny); bf16 activations for the MXU ----
    h = jnp.maximum(x * scale + shift, 0.0).astype(jnp.bfloat16)

    # Weight streamed in bf16: this kernel is HBM-bandwidth-bound on the (D, C)
    # weight (arithmetic intensity ~ B/2 FLOP/byte), so halving weight bytes is
    # the dominant win; MXU consumes bf16 natively with f32 accumulation.
    w = weight.astype(jnp.bfloat16)
    b2 = bias.astype(jnp.float32).reshape(1, C)

    if tile_n is None:
        tile_n = _choose_tile_n(C)
    if tile_b is None:
        tile_b = _choose_tile_b(B)

    # Pad to tile multiples instead of asserting divisibility (e.g. C = 5994).
    Cp = _round_up(C, tile_n)
    Bp = _round_up(B, tile_b)
    if Cp != C:
        w = jnp.pad(w, ((0, 0), (0, Cp - C)))
        b2 = jnp.pad(b2, ((0, 0), (0, Cp - C)))
    if Bp != B:
        h = jnp.pad(h, ((0, Bp - B), (0, 0)))

    # D (emb_dim, typically <= 512) fits in a single K block; no reduction axis.
    grid = (Bp // tile_b, Cp // tile_n)

    out = pl.pallas_call(
        _matmul_bias_kernel,
        out_shape=jax.ShapeDtypeStruct((Bp, Cp), jnp.float32),
        grid_spec=pltpu.PrefetchScalarGridSpec(
            num_scalar_prefetch=0,
            grid=grid,
            in_specs=[
                pl.BlockSpec((tile_b, D), lambda i, j: (i, 0)),    # activations
                pl.BlockSpec((D, tile_n), lambda i, j: (0, j)),    # weight tile
                pl.BlockSpec((1, tile_n), lambda i, j: (0, j)),    # bias tile
            ],
            out_specs=pl.BlockSpec((tile_b, tile_n), lambda i, j: (i, j)),
        ),
        compiler_params=pltpu.CompilerParams(
            # Both axes independent -> both "parallel" (v7x megacore sharding).
            dimension_semantics=("parallel", "parallel"),
            # Covers v5e's low scoped default; usage here is only a few MiB.
            vmem_limit_bytes=32 * 1024 * 1024,
        ),
    )(h, w, b2)

    return out[:B, :C]


def reference(x, gamma, beta, running_mean, running_var, weight, bias):
    inv_std = 1.0 / jnp.sqrt(running_var + EPS)
    h = (x - running_mean) * inv_std * gamma + beta
    h = jnp.maximum(h, 0.0)
    return h @ weight + bias


if __name__ == "__main__":
    # Small shapes consistent with the module: emb_dim=128, class_num=256, batch=8
    B, D, C = 8, 128, 256

    key = jax.random.PRNGKey(0)
    kx, kw, kb, kg, kbeta, km, kv = jax.random.split(key, 7)

    x = jax.random.normal(kx, (B, D), dtype=jnp.float32)

    # nn.Linear default init: U(-1/sqrt(D), 1/sqrt(D)) for weight and bias.
    bound = 1.0 / (D ** 0.5)
    weight = jax.random.uniform(kw, (D, C), minval=-bound, maxval=bound,
                                dtype=jnp.float32)
    bias = jax.random.uniform(kb, (C,), minval=-bound, maxval=bound,
                              dtype=jnp.float32)

    # BatchNorm1d parameters (non-trivial but deterministic).
    gamma = 1.0 + 0.1 * jax.random.normal(kg, (D,), dtype=jnp.float32)
    beta = 0.1 * jax.random.normal(kbeta, (D,), dtype=jnp.float32)
    running_mean = 0.1 * jax.random.normal(km, (D,), dtype=jnp.float32)
    running_var = 1.0 + 0.1 * jax.random.uniform(kv, (D,), dtype=jnp.float32)

    out = linear_head(x, gamma, beta, running_mean, running_var, weight, bias)
    out = jax.block_until_ready(out)

    ref = reference(x, gamma, beta, running_mean, running_var, weight, bias)
    assert out.shape == (B, C)
    # bf16 activation/weight streaming -> compare against f32 reference with
    # bf16-appropriate tolerance.
    assert jnp.allclose(out, ref, atol=2e-2, rtol=2e-2), "mismatch vs reference"

    print("KERNEL_OK")
</pallas_src>

<mosaic_0001>
module attributes {stable_mosaic.version = 11 : i64} {
  func.func @_matmul_bias_kernel(%arg0: i32, %arg1: i32, %arg2: memref<8x128xbf16, #tpu.memory_space<vmem>>, %arg3: memref<128x128xbf16, #tpu.memory_space<vmem>>, %arg4: memref<1x128xf32, #tpu.memory_space<vmem>>, %arg5: memref<8x128xf32, #tpu.memory_space<vmem>>) attributes {dimension_semantics = [#tpu.dimension_semantics<parallel>, #tpu.dimension_semantics<parallel>], iteration_bounds = array<i64: 1, 2>, scalar_prefetch = 0 : i64, scratch_operands = 0 : i64, tpu.core_type = #tpu.core_type<tc>, window_params = [{transform_indices = @transform_0, window_bounds = array<i64: 8, 128>}, {transform_indices = @transform_1, window_bounds = array<i64: 128, 128>}, {transform_indices = @transform_2, window_bounds = array<i64: 1, 128>}, {transform_indices = @transform_3, window_bounds = array<i64: 8, 128>}]} {
    %c0 = arith.constant 0 : index
    %c0_0 = arith.constant 0 : index
    %0 = vector.load %arg2[%c0, %c0_0] : memref<8x128xbf16, #tpu.memory_space<vmem>>, vector<8x128xbf16>
    %c0_1 = arith.constant 0 : index
    %c0_2 = arith.constant 0 : index
    %1 = vector.load %arg3[%c0_1, %c0_2] : memref<128x128xbf16, #tpu.memory_space<vmem>>, vector<128x128xbf16>
    %cst = arith.constant dense<0.000000e+00> : vector<8x128xf32>
    %2 = tpu.matmul %0, %1, %cst {dimension_numbers = #tpu.dot_dimension_numbers<[1], [0], [0], [1], [0, 0, 1, 1], [], []>} : vector<8x128xbf16>, vector<128x128xbf16>, vector<8x128xf32> -> vector<8x128xf32>
    %c0_3 = arith.constant 0 : index
    %c0_4 = arith.constant 0 : index
    %3 = vector.load %arg4[%c0_3, %c0_4] : memref<1x128xf32, #tpu.memory_space<vmem>>, vector<1x128xf32>
    %4 = vector.broadcast %3 : vector<1x128xf32> to vector<8x128xf32>
    %5 = arith.addf %2, %4 : vector<8x128xf32>
    %c0_5 = arith.constant 0 : index
    %c0_6 = arith.constant 0 : index
    %6 = vector.load %arg5[%c0_5, %c0_6] : memref<8x128xf32, #tpu.memory_space<vmem>>, vector<8x128xf32>
    tpu.vector_store %arg5[%c0_5, %c0_6], %5 {strides = array<i32>} : memref<8x128xf32, #tpu.memory_space<vmem>>, vector<8x128xf32>,
    return
  }
  func.func @transform_0(%arg0: i32, %arg1: i32) -> (i32, i32) {
    %c0_i32 = arith.constant 0 : i32
    %c0_i32_0 = arith.constant 0 : i32
    return %arg0, %c0_i32 : i32, i32
  }
  func.func @transform_1(%arg0: i32, %arg1: i32) -> (i32, i32) {
    %c0_i32 = arith.constant 0 : i32
    %c0_i32_0 = arith.constant 0 : i32
    return %c0_i32, %arg1 : i32, i32
  }
  func.func @transform_2(%arg0: i32, %arg1: i32) -> (i32, i32) {
    %c0_i32 = arith.constant 0 : i32
    %c0_i32_0 = arith.constant 0 : i32
    return %c0_i32, %arg1 : i32, i32
  }
  func.func @transform_3(%arg0: i32, %arg1: i32) -> (i32, i32) {
    %c0_i32 = arith.constant 0 : i32
    return %arg0, %arg1 : i32, i32
  }
}

</mosaic_0001>

<llo_original>
// kernel: linear_head.1
$region0: #{linear_head.1}
  #allocation0 [shape = 'u32[]', space=smem, size = 0x4, offset = 0x4, fixed_abs, tag = 'smem constant byte address 0x4 - core index']
  #allocation1 [shape = 'u32[144,128]{1,0:T(1,128)}', space=vmem, size = 0x12000, scoped, tag = 'internal scratch']
  %s0 = inlined_call_operand.vmem [shape: bf16[8,128], index: 0, kind: input, shape index: {}]
  %s1 = inlined_call_operand.vmem [shape: bf16[128,256], index: 1, kind: input, shape index: {}]
  %s2 = inlined_call_operand.vmem [shape: f32[1,256], index: 2, kind: input, shape index: {}]
  %s3 = inlined_call_operand.hbm [shape: f32[8,256], index: 3, kind: output, shape index: {}]
  %s4 = sld [smem:[#allocation0]]
  $region86: #{linear_head.1} parent=0
    _
  %s6 = ssub.s32 1, %s4
  %s7 = scalar_select 0, %s6, %s4
  $region1: #{linear_head.1} parent=0
    #allocation2 [shape = 'u8[65536]{0}', space=vmem, size = 0x10000, scoped, tag = 'input window, operand 1']
    #allocation3 [shape = 'u8[8192]{0}', space=vmem, size = 0x2000, scoped, tag = 'output window, operand 0']
    #allocation4 [shape = 's32[2]{0}', space=sflag, size = 0x8, scoped, tag = 'scoped memory for linear_head.1']
    %8 = vsyncpa [#allocation4], 0
    %s9 = scalar_lea.sflag [#allocation4], 1
    %10 = vsyncpa %s9, 0
    loop: start=0, step=1, limit=4
    $region2: #{linear_head.1} parent=1 // loop_pre_header
      _
    $region3: #{linear_head.1} parent=1 // loop_header
      %s12 = sphi 0, %s16
      %p13 = scmp.ge.s32.totalorder %s12, 4
      %s19 = sphi 0, %s31
      %s20 = sphi 0, %s27
      %s21 = sphi 0, %s19
      %s22 = sphi 0, %s20
      %s23 = sphi 0, %s21
      %s24 = sphi 0, %s22
      %s34 = sphi 0, %s36
      %s37 = sphi 0, %s34
      %s38 = sphi 0, %s37
      %s54 = sphi 0, %s38
      %s60 = sphi 0, %s62
      %s63 = sphi 0, %s60
      %s64 = sphi 0, %s63
      %s80 = sphi 0, %s64
      %s86 = sphi 0, %s88
      %s89 = sphi 0, %s86
      %s90 = sphi 0, %s89
      %s106 = sphi 0, %s90
      %s114 = sphi 0, %s116
      %s117 = sphi 0, %s114
      %s118 = sphi 0, %s117
      %s134 = sphi 0, %s118
    $region4: #{linear_head.1} parent=1 // loop_header_branch
      %15 = sbr.rel (%p13) target = $region8
    $region5: #{linear_head.1} parent=1 // loop_body
      %s17 = ssub.s32 %s12, 1
      %s18 = ssub.s32 %s12, 2
      %s25 = sadd.s32 1, %s20
      %p26 = scmp.ge.s32.totalorder %s25, 2
      %s27 = scalar_select %p26, 0, %s25
      %s28 = sadd.s32 1, %s19
      %s29 = scalar_select %p26, %s28, %s19
      %p30 = scmp.ge.s32.totalorder %s29, 1
      %s31 = scalar_select %p30, 0, %s29
      %s32 = ssub.s32 %s19, %s31
      %p33 = scmp.eq.s32.totalorder %s32, 0
      %s35 = sadd.s32 %s34, 1
      %s36 = scalar_select %p33, %s34, %s35
      %p39 = pneg %p33
      %p40 = scmp.eq.s32.totalorder %s12, 1
      %p41 = por %p39, %p40
      %p42 = scmp.ne.s32.totalorder %s34, %s37
      %p43 = scmp.eq.s32.totalorder %s12, 0
      %p44 = por %p42, %p43
      %p45 = scmp.ne.s32.totalorder %s34, %s37
      %p46 = scmp.eq.s32.totalorder %s17, 1
      %p47 = por %p45, %p46
      %p48 = scmp.ne.s32.totalorder %s37, %s38
      %p49 = scmp.eq.s32.totalorder %s17, 0
      %p50 = por %p48, %p49
      %p51 = scmp.ne.s32.totalorder %s37, %s38
      %p52 = scmp.eq.s32.totalorder %s18, 1
      %p53 = por %p51, %p52
      %p55 = scmp.ne.s32.totalorder %s38, %s54
      %p56 = scmp.eq.s32.totalorder %s18, 0
      %p57 = por %p55, %p56
      %s58 = ssub.s32 %s20, %s27
      %p59 = scmp.eq.s32.totalorder %s58, 0
      %s61 = sadd.s32 %s60, 1
      %s62 = scalar_select %p59, %s60, %s61
      %p65 = pneg %p59
      %p66 = scmp.eq.s32.totalorder %s12, 1
      %p67 = por %p65, %p66
      %p68 = scmp.ne.s32.totalorder %s60, %s63
      %p69 = scmp.eq.s32.totalorder %s12, 0
      %p70 = por %p68, %p69
      %p71 = scmp.ne.s32.totalorder %s60, %s63
      %p72 = scmp.eq.s32.totalorder %s17, 1
      %p73 = por %p71, %p72
      %p74 = scmp.ne.s32.totalorder %s63, %s64
      %p75 = scmp.eq.s32.totalorder %s17, 0
      %p76 = por %p74, %p75
      %p77 = scmp.ne.s32.totalorder %s63, %s64
      %p78 = scmp.eq.s32.totalorder %s18, 1
      %p79 = por %p77, %p78
      %p81 = scmp.ne.s32.totalorder %s64, %s80
      %p82 = scmp.eq.s32.totalorder %s18, 0
      %p83 = por %p81, %p82
      %s84 = ssub.s32 %s20, %s27
      %p85 = scmp.eq.s32.totalorder %s84, 0
      %s87 = sadd.s32 %s86, 1
      %s88 = scalar_select %p85, %s86, %s87
      %p91 = pneg %p85
      %p92 = scmp.eq.s32.totalorder %s12, 1
      %p93 = por %p91, %p92
      %p94 = scmp.ne.s32.totalorder %s86, %s89
      %p95 = scmp.eq.s32.totalorder %s12, 0
      %p96 = por %p94, %p95
      %p97 = scmp.ne.s32.totalorder %s86, %s89
      %p98 = scmp.eq.s32.totalorder %s17, 1
      %p99 = por %p97, %p98
      %p100 = scmp.ne.s32.totalorder %s89, %s90
      %p101 = scmp.eq.s32.totalorder %s17, 0
      %p102 = por %p100, %p101
      %p103 = scmp.ne.s32.totalorder %s89, %s90
      %p104 = scmp.eq.s32.totalorder %s18, 1
      %p105 = por %p103, %p104
      %p107 = scmp.ne.s32.totalorder %s90, %s106
      %p108 = scmp.eq.s32.totalorder %s18, 0
      %p109 = por %p107, %p108
      %s110 = ssub.s32 %s19, %s31
      %s111 = ssub.s32 %s20, %s27
      %s112 = sor.u32 %s110, %s111
      %p113 = scmp.eq.s32.totalorder %s112, 0
      %s115 = sadd.s32 %s114, 1
      %s116 = scalar_select %p113, %s114, %s115
      %p119 = pneg %p113
      %p120 = scmp.eq.s32.totalorder %s12, 1
      %p121 = por %p119, %p120
      %p122 = scmp.ne.s32.totalorder %s114, %s117
      %p123 = scmp.eq.s32.totalorder %s12, 0
      %p124 = por %p122, %p123
      %p125 = scmp.ne.s32.totalorder %s114, %s117
      %p126 = scmp.eq.s32.totalorder %s17, 1
      %p127 = por %p125, %p126
      %p128 = scmp.ne.s32.totalorder %s117, %s118
      %p129 = scmp.eq.s32.totalorder %s17, 0
      %p130 = por %p128, %p129
      %p131 = scmp.ne.s32.totalorder %s117, %s118
      %p132 = scmp.eq.s32.totalorder %s18, 1
      %p133 = por %p131, %p132
      %p135 = scmp.ne.s32.totalorder %s118, %s134
      %p136 = scmp.eq.s32.totalorder %s18, 0
      %p137 = por %p135, %p136
      %p138 = scmp.le.s32.totalorder 1, %s12
      %p139 = scmp.lt.s32.totalorder %s12, 3
      %p140 = pnand %p138, %p139
      %p141 = pneg %p140
      // Predicated region
      $region9: #{linear_head.1} parent=5 // pred_check
        _
      $region10: #{linear_head.1} parent=5 // pred_check_branch
        %143 = sbr.rel (%p140) target = $region12
      $region11: #{linear_head.1} parent=5 // pred_region
        %s144 = ssub.s32 %s12, 1
        // Predicated region
        $region13: #{linear_head.1} parent=11 // pred_check
          %p145 = pneg %p50
        $region14: #{linear_head.1} parent=11 // pred_check_branch
          %147 = sbr.rel (%p145) target = $region16
        $region15: #{linear_head.1} parent=11 // pred_region
          %p148 = scmp.lt.s32.totalorder %s21, 0
          %s149 = scalar_select %p148, %s21, 0
          %s150 = smul.addr %s149, 4
          %s151 = scalar_lea.vmem %s0, %s150
        $region16: #{linear_head.1} parent=11 // pred_fallthru
          _
      $region12: #{linear_head.1} parent=5 // pred_fallthru
        _
      %p152 = scmp.lt.s32.totalorder %s12, 2
      // Predicated region
      $region17: #{linear_head.1} parent=5 // pred_check
        %p153 = pneg %p152
      $region18: #{linear_head.1} parent=5 // pred_check_branch
        %155 = sbr.rel (%p153) target = $region20
      $region19: #{linear_head.1} parent=5 // pred_region
        // Predicated region
        $region21: #{linear_head.1} parent=19 // pred_check
          %p156 = pneg %p70
        $region22: #{linear_head.1} parent=19 // pred_check_branch
          %158 = sbr.rel (%p156) target = $region24
        $region23: #{linear_head.1} parent=19 // pred_region
          %s159 = sand.u32 %s60, 1
          %s160 = sand.u32 %s60, 1
          %s161 = smul.addr %s160, 64
          %s162 = scalar_lea.vmem [#allocation2], %s161
          %s163 = smul.addr %s20, 4
          %s164 = scalar_lea.vmem %s1, %s163
          // Predicated region
          $region25: #{linear_head.1} parent=23 // pred_check
            _
          $region26: #{linear_head.1} parent=23 // pred_check_branch
            %166 = sbr.rel (0) target = $region28
          $region27: #{linear_head.1} parent=23 // pred_region
            // Predicated region
            $region29: #{linear_head.1} parent=27 // pred_check
              _
            $region30: #{linear_head.1} parent=27 // pred_check_branch
              %168 = sbr.rel target = $region32
            $region31: #{linear_head.1} parent=27 // pred_region
              // Predicated region
              $region44: #{linear_head.1} parent=31 // pred_check
                _
              $region45: #{linear_head.1} parent=31 // pred_check_branch
                %213 = sbr.rel (0) target = $region47
              $region46: #{linear_head.1} parent=31 // pred_region
                loop: start=0, step=1, limit=1
                $region48: #{linear_head.1} parent=46 // loop_pre_header
                  _
                $region49: #{linear_head.1} parent=46 // loop_header
                  %s215 = sphi 0, %s219
                  %p216 = scmp.ge.s32.totalorder %s215, 1
                  %s220 = sphi %s164, %s164
                  %s221 = sphi %s162, %s162
                $region50: #{linear_head.1} parent=46 // loop_header_branch
                  %218 = sbr.rel (%p216) target = $region54
                $region51: #{linear_head.1} parent=46 // loop_body
                  _
                $region52: #{linear_head.1} parent=46 // loop_footer
                  %s219 = sadd.s32 1, %s215
                $region53: #{linear_head.1} parent=46 // loop_footer_branch
                  %214 = sbr.rel target = $region49
                $region54: #{linear_head.1} parent=46 // loop_exit
                  _
                loop: start=0, step=1, limit=1
                $region55: #{linear_head.1} parent=46 // loop_pre_header
                  _
                $region56: #{linear_head.1} parent=46 // loop_header
                  %s224 = sphi 0, %s228
                  %p225 = scmp.ge.s32.totalorder %s224, 1
                  %s229 = sphi %s164, %s164
                  %s230 = sphi %s162, %s162
                $region57: #{linear_head.1} parent=46 // loop_header_branch
                  %227 = sbr.rel (%p225) target = $region61
                $region58: #{linear_head.1} parent=46 // loop_body
                  %v231 = vld [vmem:[%s229] sm:$0xf]
                  %232 = vst [vmem:[%s230] sm:$0xf] %v231
                  %v233 = vld [vmem:[%s229 + $0x8] sm:$0xf]
                  %234 = vst [vmem:[%s230 + $0x4] sm:$0xf] %v233
                  %v235 = vld [vmem:[%s229 + $0x10] sm:$0xf]
                  %236 = vst [vmem:[%s230 + $0x8] sm:$0xf] %v235
                  %v237 = vld [vmem:[%s229 + $0x18] sm:$0xf]
                  %238 = vst [vmem:[%s230 + $0xc] sm:$0xf] %v237
                  %v239 = vld [vmem:[%s229 + $0x20] sm:$0xf]
                  %240 = vst [vmem:[%s230 + $0x10] sm:$0xf] %v239
                  %v241 = vld [vmem:[%s229 + $0x28] sm:$0xf]
                  %242 = vst [vmem:[%s230 + $0x14] sm:$0xf] %v241
                  %v243 = vld [vmem:[%s229 + $0x30] sm:$0xf]
                  %244 = vst [vmem:[%s230 + $0x18] sm:$0xf] %v243
                  %v245 = vld [vmem:[%s229 + $0x38] sm:$0xf]
                  %246 = vst [vmem:[%s230 + $0x1c] sm:$0xf] %v245
                  %v247 = vld [vmem:[%s229 + $0x40] sm:$0xf]
                  %248 = vst [vmem:[%s230 + $0x20] sm:$0xf] %v247
                  %v249 = vld [vmem:[%s229 + $0x48] sm:$0xf]
                  %250 = vst [vmem:[%s230 + $0x24] sm:$0xf] %v249
                  %v251 = vld [vmem:[%s229 + $0x50] sm:$0xf]
                  %252 = vst [vmem:[%s230 + $0x28] sm:$0xf] %v251
                  %v253 = vld [vmem:[%s229 + $0x58] sm:$0xf]
                  %254 = vst [vmem:[%s230 + $0x2c] sm:$0xf] %v253
                  %v255 = vld [vmem:[%s229 + $0x60] sm:$0xf]
                  %256 = vst [vmem:[%s230 + $0x30] sm:$0xf] %v255
                  %v257 = vld [vmem:[%s229 + $0x68] sm:$0xf]
                  %258 = vst [vmem:[%s230 + $0x34] sm:$0xf] %v257
                  %v259 = vld [vmem:[%s229 + $0x70] sm:$0xf]
                  %260 = vst [vmem:[%s230 + $0x38] sm:$0xf] %v259
                  %v261 = vld [vmem:[%s229 + $0x78] sm:$0xf]
                  %262 = vst [vmem:[%s230 + $0x3c] sm:$0xf] %v261
                $region59: #{linear_head.1} parent=46 // loop_footer
                  %s228 = sadd.s32 1, %s224
                $region60: #{linear_head.1} parent=46 // loop_footer_branch
                  %223 = sbr.rel target = $region56
                $region61: #{linear_head.1} parent=46 // loop_exit
                  _
              $region47: #{linear_head.1} parent=31 // pred_fallthru
                _
            $region32: #{linear_head.1} parent=27 // pred_fallthru
              _
            // Predicated region
            $region33: #{linear_head.1} parent=27 // pred_check
              _
            $region34: #{linear_head.1} parent=27 // pred_check_branch
              %170 = sbr.rel (0) target = $region36
            $region35: #{linear_head.1} parent=27 // pred_region
              loop: start=0, step=1, limit=1
              $region37: #{linear_head.1} parent=35 // loop_pre_header
                _
              $region38: #{linear_head.1} parent=35 // loop_header
                %s173 = sphi 0, %s177
                %p174 = scmp.ge.s32.totalorder %s173, 1
                %s178 = sphi %s164, %s164
                %s179 = sphi %s162, %s162
              $region39: #{linear_head.1} parent=35 // loop_header_branch
                %176 = sbr.rel (%p174) target = $region43
              $region40: #{linear_head.1} parent=35 // loop_body
                %v180 = vld [vmem:[%s178] sm:$0xf]
                %181 = vst [vmem:[%s179] sm:$0xf] %v180
                %v182 = vld [vmem:[%s178 + $0x8] sm:$0xf]
                %183 = vst [vmem:[%s179 + $0x4] sm:$0xf] %v182
                %v184 = vld [vmem:[%s178 + $0x10] sm:$0xf]
                %185 = vst [vmem:[%s179 + $0x8] sm:$0xf] %v184
                %v186 = vld [vmem:[%s178 + $0x18] sm:$0xf]
                %187 = vst [vmem:[%s179 + $0xc] sm:$0xf] %v186
                %v188 = vld [vmem:[%s178 + $0x20] sm:$0xf]
                %189 = vst [vmem:[%s179 + $0x10] sm:$0xf] %v188
                %v190 = vld [vmem:[%s178 + $0x28] sm:$0xf]
                %191 = vst [vmem:[%s179 + $0x14] sm:$0xf] %v190
                %v192 = vld [vmem:[%s178 + $0x30] sm:$0xf]
                %193 = vst [vmem:[%s179 + $0x18] sm:$0xf] %v192
                %v194 = vld [vmem:[%s178 + $0x38] sm:$0xf]
                %195 = vst [vmem:[%s179 + $0x1c] sm:$0xf] %v194
                %v196 = vld [vmem:[%s178 + $0x40] sm:$0xf]
                %197 = vst [vmem:[%s179 + $0x20] sm:$0xf] %v196
                %v198 = vld [vmem:[%s178 + $0x48] sm:$0xf]
                %199 = vst [vmem:[%s179 + $0x24] sm:$0xf] %v198
                %v200 = vld [vmem:[%s178 + $0x50] sm:$0xf]
                %201 = vst [vmem:[%s179 + $0x28] sm:$0xf] %v200
                %v202 = vld [vmem:[%s178 + $0x58] sm:$0xf]
                %203 = vst [vmem:[%s179 + $0x2c] sm:$0xf] %v202
                %v204 = vld [vmem:[%s178 + $0x60] sm:$0xf]
                %205 = vst [vmem:[%s179 + $0x30] sm:$0xf] %v204
                %v206 = vld [vmem:[%s178 + $0x68] sm:$0xf]
                %207 = vst [vmem:[%s179 + $0x34] sm:$0xf] %v206
                %v208 = vld [vmem:[%s178 + $0x70] sm:$0xf]
                %209 = vst [vmem:[%s179 + $0x38] sm:$0xf] %v208
                %v210 = vld [vmem:[%s178 + $0x78] sm:$0xf]
                %211 = vst [vmem:[%s179 + $0x3c] sm:$0xf] %v210
              $region41: #{linear_head.1} parent=35 // loop_footer
                %s177 = sadd.s32 1, %s173
              $region42: #{linear_head.1} parent=35 // loop_footer_branch
                %172 = sbr.rel target = $region38
              $region43: #{linear_head.1} parent=35 // loop_exit
                _
            $region36: #{linear_head.1} parent=27 // pred_fallthru
              _
          $region28: #{linear_head.1} parent=23 // pred_fallthru
            _
          %263 = vnop
        $region24: #{linear_head.1} parent=19 // pred_fallthru
          _
        // Predicated region
        $region62: #{linear_head.1} parent=19 // pred_check
          %p264 = pneg %p96
        $region63: #{linear_head.1} parent=19 // pred_check_branch
          %266 = sbr.rel (%p264) target = $region65
        $region64: #{linear_head.1} parent=19 // pred_region
          %p267 = scmp.lt.s32.totalorder %s20, 1
          %s268 = scalar_select %p267, %s20, 1
          %s269 = scalar_lea.vmem %s2, %s268
        $region65: #{linear_head.1} parent=19 // pred_fallthru
          _
      $region20: #{linear_head.1} parent=5 // pred_fallthru
        _
      %p270 = scmp.le.s32.totalorder 1, %s12
      %p271 = scmp.lt.s32.totalorder %s12, 3
      %p272 = pnand %p270, %p271
      %p273 = pneg %p272
      // Predicated region
      $region66: #{linear_head.1} parent=5 // pred_check
        _
      $region67: #{linear_head.1} parent=5 // pred_check_branch
        %275 = sbr.rel (%p272) target = $region69
      $region68: #{linear_head.1} parent=5 // pred_region
        %s276 = ssub.s32 %s12, 1
        %s277 = sand.u32 %s63, 1
        %s278 = sand.u32 %s63, 1
        %s279 = smul.addr %s278, 64
        %s280 = scalar_lea.vmem [#allocation2], %s279
        // Predicated region
        $region70: #{linear_head.1} parent=68 // pred_check
          %p281 = pneg %p76
        $region71: #{linear_head.1} parent=68 // pred_check_branch
          %283 = sbr.rel (%p281) target = $region73
        $region72: #{linear_head.1} parent=68 // pred_region
          _
        $region73: #{linear_head.1} parent=68 // pred_fallthru
          _
        %p284 = scmp.lt.s32.totalorder %s21, 0
        %s285 = scalar_select %p284, %s21, 0
        %s286 = smul.addr %s285, 4
        %s287 = scalar_lea.vmem %s0, %s286
        %p288 = pneg %p50
        %p289 = pneg %p47
        %s290 = sand.u32 %s63, 1
        %s291 = sand.u32 %s63, 1
        %s292 = smul.addr %s291, 64
        %s293 = scalar_lea.vmem [#allocation2], %s292
        %p294 = pneg %p76
        %p295 = pneg %p73
        %p296 = scmp.lt.s32.totalorder %s22, 1
        %s297 = scalar_select %p296, %s22, 1
        %s298 = scalar_lea.vmem %s2, %s297
        %p299 = pneg %p102
        %p300 = pneg %p99
        %p301 = pneg %p130
        %p302 = pneg %p127
        %s303 = sand.u32 %s117, 1
        %s304 = scalar_lea.sflag [#allocation4], %s303
        %s305 = sand.u32 %s117, 1
        %s306 = smul.addr %s305, 8
        %s307 = scalar_lea.vmem [#allocation3], %s306
        %p308 = scmp.lt.s32.totalorder %s21, 0
        %s309 = scalar_select %p308, %s21, 0
        %s310 = smul.addr %s309, 4
        %s311 = scalar_lea.vmem %s0, %s310
        %p312 = scmp.lt.s32.totalorder %s22, 1
        %s313 = scalar_select %p312, %s22, 1
        %s314 = scalar_lea.vmem %s2, %s313
        %v316 = vld [vmem:[%s311] sm:$0xf]
        %v317 = vld [vmem:[%s280] sm:$0xf]
        %v318 = vld [vmem:[%s280 + $0x4] sm:$0xf]
        %v319 = vld [vmem:[%s280 + $0x8] sm:$0xf]
        %v320 = vld [vmem:[%s280 + $0xc] sm:$0xf]
        %v321 = vld [vmem:[%s280 + $0x10] sm:$0xf]
        %v322 = vld [vmem:[%s280 + $0x14] sm:$0xf]
        %v323 = vld [vmem:[%s280 + $0x18] sm:$0xf]
        %v324 = vld [vmem:[%s280 + $0x1c] sm:$0xf]
        %v325 = vld [vmem:[%s280 + $0x20] sm:$0xf]
        %v326 = vld [vmem:[%s280 + $0x24] sm:$0xf]
        %v327 = vld [vmem:[%s280 + $0x28] sm:$0xf]
        %v328 = vld [vmem:[%s280 + $0x2c] sm:$0xf]
        %v329 = vld [vmem:[%s280 + $0x30] sm:$0xf]
        %v330 = vld [vmem:[%s280 + $0x34] sm:$0xf]
        %v331 = vld [vmem:[%s280 + $0x38] sm:$0xf]
        %v332 = vld [vmem:[%s280 + $0x3c] sm:$0xf]
        %v333 = vld [vmem:[%s314] sm:$0x1]
        %v335 = vlaneseq
        %v336 = vshrl.u32 %v335, 7
        %v337 = vsub.s32 0, %v336
        %v338 = vrot.slane %v333, %v337
        %v356 = vunpack.c.l.b16 %v317
        %v357 = vunpack.c.l.b16 %v318
        %v358 = vunpack.c.l.b16 %v319
        %v359 = vunpack.c.l.b16 %v320
        %v360 = vunpack.c.l.b16 %v321
        %v361 = vunpack.c.l.b16 %v322
        %v362 = vunpack.c.l.b16 %v323
        %v363 = vunpack.c.l.b16 %v324
        %v364 = vunpack.c.l.b16 %v325
        %v365 = vunpack.c.l.b16 %v326
        %v366 = vunpack.c.l.b16 %v327
        %v367 = vunpack.c.l.b16 %v328
        %v368 = vunpack.c.l.b16 %v329
        %v369 = vunpack.c.l.b16 %v330
        %v370 = vunpack.c.l.b16 %v331
        %v371 = vunpack.c.l.b16 %v332
        %v372 = vpack.c.b16 %v357, %v356
        %v373 = vpack.c.b16 %v359, %v358
        %v374 = vpack.c.b16 %v361, %v360
        %v375 = vpack.c.b16 %v363, %v362
        %v376 = vpack.c.b16 %v365, %v364
        %v377 = vpack.c.b16 %v367, %v366
        %v378 = vpack.c.b16 %v369, %v368
        %v379 = vpack.c.b16 %v371, %v370
        %388 = vmatprep.subr.bf16.mxu0 0
        %389 = vmatpush1.bf16.msra.mxu0 %v372
        %390 = vmatprep.subr.bf16.mxu0 0
        %391 = vmatpush1.bf16.msra.mxu0 %v373
        %392 = vmatprep.subr.bf16.mxu0 0
        %393 = vmatpush1.bf16.msra.mxu0 %v374
        %394 = vmatprep.subr.bf16.mxu0 0
        %395 = vmatpush1.bf16.msra.mxu0 %v375
        %396 = vmatprep.subr.bf16.mxu0 0
        %397 = vmatpush1.bf16.msra.mxu0 %v376
        %398 = vmatprep.subr.bf16.mxu0 0
        %399 = vmatpush1.bf16.msra.mxu0 %v377
        %400 = vmatprep.subr.bf16.mxu0 0
        %401 = vmatpush1.bf16.msra.mxu0 %v378
        %402 = vmatprep.subr.bf16.mxu0 0
        %403 = vmatpush1.bf16.msra.mxu0 %v379
        %404 = vmatprep.subr.bf16.mxu0 0
        %405 = vmatpush1.bf16.msra.mxu0 0
        %406 = vmatprep.subr.bf16.mxu0 0
        %407 = vmatpush1.bf16.msra.mxu0 0
        %408 = vmatprep.subr.bf16.mxu0 0
        %409 = vmatpush1.bf16.msra.mxu0 0
        %410 = vmatprep.subr.bf16.mxu0 0
        %411 = vmatpush1.bf16.msra.mxu0 0
        %412 = vmatprep.subr.bf16.mxu0 0
        %413 = vmatpush1.bf16.msra.mxu0 0
        %414 = vmatprep.subr.bf16.mxu0 0
        %415 = vmatpush1.bf16.msra.mxu0 0
        %416 = vmatprep.subr.bf16.mxu0 0
        %417 = vmatpush1.bf16.msra.mxu0 0
        %418 = vmatprep.subr.bf16.mxu0 0
        %419 = vmatpush1.bf16.msra.mxu0 0
        %420 = vmatprep.mubr.bf16.mxu0 0
        %421 = vmatmul.mubr.bf16.gmra.mrb[0].mxu0 %v316
        %v422 = vpop.f32.mrb[0].mxu0
        %v423 = vadd.f32 %v338, %v422
        %v424 = vpop.f32.mrb[0].mxu0
        %v425 = vpop.f32.mrb[0].mxu0
        %v426 = vpop.f32.mrb[0].mxu0
        %427 = vdwg.mxu0
        %428 = vst [vmem:[%s307] sm:$0xff] %v423
        %s429 = sand.u32 %s117, 1
        %s430 = scalar_lea.sflag [#allocation4], %s429
        %s431 = sand.u32 %s117, 1
        %s432 = smul.addr %s431, 8
        %s433 = scalar_lea.vmem [#allocation3], %s432
        // Predicated region
        $region74: #{linear_head.1} parent=68 // pred_check
          %p434 = pneg %p127
        $region75: #{linear_head.1} parent=68 // pred_check_branch
          %436 = sbr.rel (%p434) target = $region77
        $region76: #{linear_head.1} parent=68 // pred_region
          %s438 = ssub.s32 128, 128
          %439 = vsyncadd %s430, %s438
          %s440 = smul.addr %s21, 2
          %s441 = sadd.s32 %s22, %s440
          %s442 = smul.addr %s441, 128
          %s443 = scalar_lea.hbm %s3, %s442
          %s445 = sshll.u32 %s433, 4
          %s446 = int_to_ptr.vmem [resolvable:$true] %s445
          %448 = dma.vmem_to_hbm [thread:$0]  %s446, 128, %s443, %s430
        $region77: #{linear_head.1} parent=68 // pred_fallthru
          _
      $region69: #{linear_head.1} parent=5 // pred_fallthru
        _
      %p449 = scmp.le.s32.totalorder 2, %s12
      // Predicated region
      $region78: #{linear_head.1} parent=5 // pred_check
        %p450 = pneg %p449
      $region79: #{linear_head.1} parent=5 // pred_check_branch
        %452 = sbr.rel (%p450) target = $region81
      $region80: #{linear_head.1} parent=5 // pred_region
        %s453 = ssub.s32 %s12, 2
        // Predicated region
        $region82: #{linear_head.1} parent=80 // pred_check
          %p454 = pneg %p133
        $region83: #{linear_head.1} parent=80 // pred_check_branch
          %456 = sbr.rel (%p454) target = $region85
        $region84: #{linear_head.1} parent=80 // pred_region
          %s457 = sand.u32 %s118, 1
          %s458 = scalar_lea.sflag [#allocation4], %s457
          %s459 = sand.u32 %s118, 1
          %s460 = smul.addr %s459, 8
          %s461 = scalar_lea.vmem [#allocation3], %s460
          %462 = dma.done %s458, 128
        $region85: #{linear_head.1} parent=80 // pred_fallthru
          _
      $region81: #{linear_head.1} parent=5 // pred_fallthru
        _
    $region6: #{linear_head.1} parent=1 // loop_footer
      %s16 = sadd.s32 1, %s12
    $region7: #{linear_head.1} parent=1 // loop_footer_branch
      %11 = sbr.rel target = $region3
    $region8: #{linear_head.1} parent=1 // loop_exit
      _
    %463 = vsyncpa [#allocation4], 1
    %s464 = scalar_lea.sflag [#allocation4], 1
    %465 = vsyncpa %s464, 1

</llo_original>
